<compile_context>
chip_gen: v6e
topology: v6e:2x2x1
jax: 0.10.0
libtpu: 0.0.40
codegen_flags: <defaults>
</compile_context>

<pallas_src>
import math
import functools

import jax
import jax.numpy as jnp
from jax.experimental import pallas as pl
from jax.experimental.pallas import tpu as pltpu


def cross_attention_kernel(x_ref, vf_ref,
                           wq_ref, bq_ref,
                           wkv_ref, bkv_ref,
                           wp_ref, bp_ref,
                           o_ref, y_scr, *, n_head):
    # x_ref:   (T, C)   bf16   one batch element's text tokens
    # vf_ref:  (V, C)   bf16   one batch element's visual tokens
    # wq_ref:  (C, C)   bf16   (softmax scale 1/sqrt(hd) pre-folded)
    # bq_ref:  (1, C)   f32    (scale pre-folded)
    # wkv_ref: (C, 2C)  bf16   fused [K | V] projection
    # bkv_ref: (1, 2C)  f32
    # wp_ref:  (C, C)   bf16   output projection
    # bp_ref:  (1, C)   f32
    # o_ref:   (T, C)   bf16
    # y_scr:   (T, C)   bf16   VMEM scratch: per-head outputs concatenated on lanes
    C = wq_ref.shape[0]
    hd = C // n_head

    # Projections: bf16 MXU matmuls, f32 accumulation + bias, then a single
    # cast to bf16 (halves the largest live intermediates).
    q = (jnp.dot(x_ref[...], wq_ref[...], preferred_element_type=jnp.float32)
         + bq_ref[...]).astype(jnp.bfloat16)                               # (T, C)
    kv = (jnp.dot(vf_ref[...], wkv_ref[...], preferred_element_type=jnp.float32)
          + bkv_ref[...]).astype(jnp.bfloat16)                             # (V, 2C)

    # Per-head attention (n_head is small & static -> cheap unroll). Heads are
    # written into lane slices of the scratch so the output projection is one
    # full-depth matmul afterwards.
    for h in range(n_head):
        qh = q[:, h * hd:(h + 1) * hd]                                     # (T, hd) bf16
        kh = kv[:, h * hd:(h + 1) * hd]                                    # (V, hd) bf16
        vh = kv[:, C + h * hd:C + (h + 1) * hd]                            # (V, hd) bf16

        # Transposed contraction (contract last dims): no explicit kh.T, so no
        # XLU transpose competing with MXU pushes.
        att = jax.lax.dot_general(
            qh, kh, dimension_numbers=(((1,), (1,)), ((), ())),
            preferred_element_type=jnp.float32)                            # (T, V) f32

        att = att - jnp.max(att, axis=-1, keepdims=True)
        e = jnp.exp(att)                                                   # f32 EUP
        # EUP approximate reciprocal instead of a VPU divide.
        p = e * pl.reciprocal(jnp.sum(e, axis=-1, keepdims=True), approx=True)

        oh = jnp.dot(p.astype(jnp.bfloat16), vh,
                     preferred_element_type=jnp.float32)                   # (T, hd)
        y_scr[:, h * hd:(h + 1) * hd] = oh.astype(jnp.bfloat16)

    # Single full-depth (K = C) output projection for the whole block.
    out = jnp.dot(y_scr[...], wp_ref[...],
                  preferred_element_type=jnp.float32) + bp_ref[...]        # (T, C) f32
    o_ref[...] = out.astype(o_ref.dtype)


def prepare_cross_attention_params(W_attn, b_attn, W_proj, b_proj, n_head):
    """One-time host/weight prep: split c_attn, fold scale into Q, fuse K|V,
    transpose to (in, out), cast matmul operands to bf16."""
    C = W_proj.shape[0]
    hd = C // n_head
    scale = 1.0 / math.sqrt(hd)
    wq = (W_attn[:C, :].T * scale).astype(jnp.bfloat16)             # (C, C)
    bq = (b_attn[:C] * scale).reshape(1, C).astype(jnp.float32)     # (1, C)
    wkv = W_attn[C:, :].T.astype(jnp.bfloat16)                      # (C, 2C) = [Wk | Wv]
    bkv = b_attn[C:].reshape(1, 2 * C).astype(jnp.float32)          # (1, 2C)
    wp = W_proj.T.astype(jnp.bfloat16)                              # (C, C)
    bp = b_proj.reshape(1, C).astype(jnp.float32)                   # (1, C)
    return wq, bq, wkv, bkv, wp, bp


def cross_attention_pallas(x, vf, wq, bq, wkv, bkv, wp, bp, *, n_head,
                           out_dtype=jnp.bfloat16):
    B, T, C = x.shape
    _, V, _ = vf.shape
    assert C % n_head == 0

    # Lane-dense 2-D activation slabs (reshapes are free outside the kernel).
    x2 = x.reshape(B * T, C).astype(jnp.bfloat16)
    vf2 = vf.reshape(B * V, C).astype(jnp.bfloat16)

    kernel = functools.partial(cross_attention_kernel, n_head=n_head)
    const2d = lambda b: (0, 0)  # weights are grid-invariant (no re-DMA across steps)

    out2 = pl.pallas_call(
        kernel,
        out_shape=jax.ShapeDtypeStruct((B * T, C), out_dtype),
        grid=(B,),                                                   # batch = grid axis
        in_specs=[
            pl.BlockSpec((T, C), lambda b: (b, 0)),                  # x slab
            pl.BlockSpec((V, C), lambda b: (b, 0)),                  # vf slab
            pl.BlockSpec((C, C), const2d), pl.BlockSpec((1, C), const2d),        # Wq, bq
            pl.BlockSpec((C, 2 * C), const2d), pl.BlockSpec((1, 2 * C), const2d),  # Wkv, bkv
            pl.BlockSpec((C, C), const2d), pl.BlockSpec((1, C), const2d),        # Wp, bp
        ],
        out_specs=pl.BlockSpec((T, C), lambda b: (b, 0)),
        scratch_shapes=[pltpu.VMEM((T, C), jnp.bfloat16)],           # head-concat buffer
        compiler_params=pltpu.CompilerParams(
            dimension_semantics=("parallel",),
            vmem_limit_bytes=32 * 1024 * 1024),
    )(x2, vf2, wq, bq, wkv, bkv, wp, bp)
    return out2.reshape(B, T, C)


def cross_attention_reference(x, vf, W_attn, b_attn, W_proj, b_proj, n_head):
    """Pure-JAX (f32) reference mirroring the PyTorch forward."""
    B, T, C = x.shape
    _, V, _ = vf.shape
    hd = C // n_head
    q = (x @ W_attn.T + b_attn)[:, :, :C]
    kv = vf @ W_attn.T + b_attn
    k, v = kv[:, :, C:2 * C], kv[:, :, 2 * C:]
    q = q.reshape(B, T, n_head, hd).transpose(0, 2, 1, 3)
    k = k.reshape(B, V, n_head, hd).transpose(0, 2, 1, 3)
    v = v.reshape(B, V, n_head, hd).transpose(0, 2, 1, 3)
    att = (q @ jnp.swapaxes(k, -2, -1)) * (1.0 / math.sqrt(hd))
    att = jax.nn.softmax(att, axis=-1)
    y = (att @ v).transpose(0, 2, 1, 3).reshape(B, T, C)
    return y @ W_proj.T + b_proj


if __name__ == "__main__":
    # Small config: n_embd=32, n_head=4, batch=2, text seq T=16, visual seq V=32.
    # (T, V multiples of 16 so bf16 blocks are sublane-packed without masking.)
    B, T, V, C, n_head = 2, 16, 32, 32, 4

    key = jax.random.PRNGKey(0)
    kx, kv_, kw1, kb1, kw2, kb2 = jax.random.split(key, 6)

    x = jax.random.normal(kx, (B, T, C), dtype=jnp.float32)
    vf = jax.random.normal(kv_, (B, V, C), dtype=jnp.float32)

    # Deterministic "module" parameters (PyTorch Linear shapes: (out, in)).
    W_attn = jax.random.normal(kw1, (3 * C, C), dtype=jnp.float32) * 0.05
    b_attn = jax.random.normal(kb1, (3 * C,), dtype=jnp.float32) * 0.05
    W_proj = jax.random.normal(kw2, (C, C), dtype=jnp.float32) * 0.05
    b_proj = jax.random.normal(kb2, (C,), dtype=jnp.float32) * 0.05

    # Weight prep runs once (outside the per-call path); forward is jitted.
    params = prepare_cross_attention_params(W_attn, b_attn, W_proj, b_proj, n_head)
    forward = jax.jit(functools.partial(cross_attention_pallas, n_head=n_head))

    out = forward(x, vf, *params)
    out = jax.block_until_ready(out)

    ref = cross_attention_reference(x, vf, W_attn, b_attn, W_proj, b_proj, n_head)
    assert out.shape == (B, T, C), out.shape
    # bf16 MXU operands / bf16 output + approximate reciprocal => relaxed tolerance.
    out_f32 = out.astype(jnp.float32)
    err = float(jnp.max(jnp.abs(out_f32 - ref)))
    assert jnp.allclose(out_f32, ref, atol=3e-2, rtol=3e-2), err

    print("KERNEL_OK")
</pallas_src>

<mosaic_0001>
module attributes {stable_mosaic.version = 11 : i64} {
  func.func @cross_attention_kernel(%arg0: i32, %arg1: memref<16x32xbf16, #tpu.memory_space<vmem>>, %arg2: memref<32x32xbf16, #tpu.memory_space<vmem>>, %arg3: memref<32x32xbf16, #tpu.memory_space<vmem>>, %arg4: memref<1x32xf32, #tpu.memory_space<vmem>>, %arg5: memref<32x64xbf16, #tpu.memory_space<vmem>>, %arg6: memref<1x64xf32, #tpu.memory_space<vmem>>, %arg7: memref<32x32xbf16, #tpu.memory_space<vmem>>, %arg8: memref<1x32xf32, #tpu.memory_space<vmem>>, %arg9: memref<16x32xbf16, #tpu.memory_space<vmem>>, %arg10: memref<16x32xbf16, #tpu.memory_space<vmem>>) attributes {dimension_semantics = [#tpu.dimension_semantics<parallel>], iteration_bounds = array<i64: 2>, scalar_prefetch = 0 : i64, scratch_operands = 1 : i64, tpu.core_type = #tpu.core_type<tc>, window_params = [{transform_indices = @transform_0, window_bounds = array<i64: 16, 32>}, {transform_indices = @transform_1, window_bounds = array<i64: 32, 32>}, {pipeline_mode = #tpu.pipeline_mode<synchronous>, transform_indices = @transform_2, window_bounds = array<i64: 32, 32>}, {pipeline_mode = #tpu.pipeline_mode<synchronous>, transform_indices = @transform_3, window_bounds = array<i64: 1, 32>}, {pipeline_mode = #tpu.pipeline_mode<synchronous>, transform_indices = @transform_4, window_bounds = array<i64: 32, 64>}, {pipeline_mode = #tpu.pipeline_mode<synchronous>, transform_indices = @transform_5, window_bounds = array<i64: 1, 64>}, {pipeline_mode = #tpu.pipeline_mode<synchronous>, transform_indices = @transform_6, window_bounds = array<i64: 32, 32>}, {pipeline_mode = #tpu.pipeline_mode<synchronous>, transform_indices = @transform_7, window_bounds = array<i64: 1, 32>}, {transform_indices = @transform_8, window_bounds = array<i64: 16, 32>}]} {
    %c0 = arith.constant 0 : index
    %c0_0 = arith.constant 0 : index
    %0 = vector.load %arg1[%c0, %c0_0] : memref<16x32xbf16, #tpu.memory_space<vmem>>, vector<16x32xbf16>
    %c0_1 = arith.constant 0 : index
    %c0_2 = arith.constant 0 : index
    %1 = vector.load %arg3[%c0_1, %c0_2] : memref<32x32xbf16, #tpu.memory_space<vmem>>, vector<32x32xbf16>
    %cst = arith.constant dense<0.000000e+00> : vector<16x32xf32>
    %2 = tpu.matmul %0, %1, %cst {dimension_numbers = #tpu.dot_dimension_numbers<[1], [0], [0], [1], [0, 0, 1, 1], [], []>} : vector<16x32xbf16>, vector<32x32xbf16>, vector<16x32xf32> -> vector<16x32xf32>
    %c0_3 = arith.constant 0 : index
    %c0_4 = arith.constant 0 : index
    %3 = vector.load %arg4[%c0_3, %c0_4] : memref<1x32xf32, #tpu.memory_space<vmem>>, vector<1x32xf32>
    %4 = vector.broadcast %3 : vector<1x32xf32> to vector<16x32xf32>
    %5 = arith.addf %2, %4 : vector<16x32xf32>
    %6 = arith.truncf %5 : vector<16x32xf32> to vector<16x32xbf16>
    %c0_5 = arith.constant 0 : index
    %c0_6 = arith.constant 0 : index
    %7 = vector.load %arg2[%c0_5, %c0_6] : memref<32x32xbf16, #tpu.memory_space<vmem>>, vector<32x32xbf16>
    %c0_7 = arith.constant 0 : index
    %c0_8 = arith.constant 0 : index
    %8 = vector.load %arg5[%c0_7, %c0_8] : memref<32x64xbf16, #tpu.memory_space<vmem>>, vector<32x64xbf16>
    %cst_9 = arith.constant dense<0.000000e+00> : vector<32x64xf32>
    %9 = tpu.matmul %7, %8, %cst_9 {dimension_numbers = #tpu.dot_dimension_numbers<[1], [0], [0], [1], [0, 0, 1, 1], [], []>} : vector<32x32xbf16>, vector<32x64xbf16>, vector<32x64xf32> -> vector<32x64xf32>
    %c0_10 = arith.constant 0 : index
    %c0_11 = arith.constant 0 : index
    %10 = vector.load %arg6[%c0_10, %c0_11] : memref<1x64xf32, #tpu.memory_space<vmem>>, vector<1x64xf32>
    %11 = vector.broadcast %10 : vector<1x64xf32> to vector<32x64xf32>
    %12 = arith.addf %9, %11 : vector<32x64xf32>
    %13 = arith.truncf %12 : vector<32x64xf32> to vector<32x64xbf16>
    %14 = vector.extract_strided_slice %6 {offsets = [0, 0], sizes = [16, 8], strides = [1, 1]} : vector<16x32xbf16> to vector<16x8xbf16>
    %15 = vector.extract_strided_slice %13 {offsets = [0, 0], sizes = [32, 8], strides = [1, 1]} : vector<32x64xbf16> to vector<32x8xbf16>
    %16 = vector.extract_strided_slice %13 {offsets = [0, 32], sizes = [32, 8], strides = [1, 1]} : vector<32x64xbf16> to vector<32x8xbf16>
    %cst_12 = arith.constant dense<0.000000e+00> : vector<16x32xf32>
    %17 = tpu.matmul %14, %15, %cst_12 {dimension_numbers = #tpu.dot_dimension_numbers<[1], [1], [0], [0], [0, 0, 1, 0], [], []>} : vector<16x8xbf16>, vector<32x8xbf16>, vector<16x32xf32> -> vector<16x32xf32>
    %cst_13 = arith.constant dense<0xFF800000> : vector<16xf32>
    %18 = vector.multi_reduction <maximumf>, %17, %cst_13 [1] : vector<16x32xf32> to vector<16xf32>
    %19 = vector.shape_cast %18 : vector<16xf32> to vector<16x1xf32>
    %20 = vector.broadcast %19 : vector<16x1xf32> to vector<16x32xf32>
    %21 = arith.subf %17, %20 : vector<16x32xf32>
    %22 = math.exp %21 : vector<16x32xf32>
    %cst_14 = arith.constant dense<0.000000e+00> : vector<16xf32>
    %23 = vector.multi_reduction <add>, %22, %cst_14 [1] : vector<16x32xf32> to vector<16xf32>
    %24 = vector.shape_cast %23 : vector<16xf32> to vector<16x1xf32>
    %25 = tpu.reciprocal %24 {approx = true} : vector<16x1xf32> -> vector<16x1xf32>
    %26 = vector.broadcast %25 : vector<16x1xf32> to vector<16x32xf32>
    %27 = arith.mulf %22, %26 : vector<16x32xf32>
    %28 = arith.truncf %27 : vector<16x32xf32> to vector<16x32xbf16>
    %cst_15 = arith.constant dense<0.000000e+00> : vector<16x8xf32>
    %29 = tpu.matmul %28, %16, %cst_15 {dimension_numbers = #tpu.dot_dimension_numbers<[1], [0], [0], [1], [0, 0, 1, 1], [], []>} : vector<16x32xbf16>, vector<32x8xbf16>, vector<16x8xf32> -> vector<16x8xf32>
    %30 = arith.truncf %29 : vector<16x8xf32> to vector<16x8xbf16>
    %c0_16 = arith.constant 0 : index
    %c0_17 = arith.constant 0 : index
    %31 = vector.load %arg10[%c0_16, %c0_17] : memref<16x32xbf16, #tpu.memory_space<vmem>>, vector<16x8xbf16>
    tpu.vector_store %arg10[%c0_16, %c0_17], %30 {strides = array<i32>} : memref<16x32xbf16, #tpu.memory_space<vmem>>, vector<16x8xbf16>,
    %32 = vector.extract_strided_slice %6 {offsets = [0, 8], sizes = [16, 8], strides = [1, 1]} : vector<16x32xbf16> to vector<16x8xbf16>
    %33 = vector.extract_strided_slice %13 {offsets = [0, 8], sizes = [32, 8], strides = [1, 1]} : vector<32x64xbf16> to vector<32x8xbf16>
    %34 = vector.extract_strided_slice %13 {offsets = [0, 40], sizes = [32, 8], strides = [1, 1]} : vector<32x64xbf16> to vector<32x8xbf16>
    %cst_18 = arith.constant dense<0.000000e+00> : vector<16x32xf32>
    %35 = tpu.matmul %32, %33, %cst_18 {dimension_numbers = #tpu.dot_dimension_numbers<[1], [1], [0], [0], [0, 0, 1, 0], [], []>} : vector<16x8xbf16>, vector<32x8xbf16>, vector<16x32xf32> -> vector<16x32xf32>
    %cst_19 = arith.constant dense<0xFF800000> : vector<16xf32>
    %36 = vector.multi_reduction <maximumf>, %35, %cst_19 [1] : vector<16x32xf32> to vector<16xf32>
    %37 = vector.shape_cast %36 : vector<16xf32> to vector<16x1xf32>
    %38 = vector.broadcast %37 : vector<16x1xf32> to vector<16x32xf32>
    %39 = arith.subf %35, %38 : vector<16x32xf32>
    %40 = math.exp %39 : vector<16x32xf32>
    %cst_20 = arith.constant dense<0.000000e+00> : vector<16xf32>
    %41 = vector.multi_reduction <add>, %40, %cst_20 [1] : vector<16x32xf32> to vector<16xf32>
    %42 = vector.shape_cast %41 : vector<16xf32> to vector<16x1xf32>
    %43 = tpu.reciprocal %42 {approx = true} : vector<16x1xf32> -> vector<16x1xf32>
    %44 = vector.broadcast %43 : vector<16x1xf32> to vector<16x32xf32>
    %45 = arith.mulf %40, %44 : vector<16x32xf32>
    %46 = arith.truncf %45 : vector<16x32xf32> to vector<16x32xbf16>
    %cst_21 = arith.constant dense<0.000000e+00> : vector<16x8xf32>
    %47 = tpu.matmul %46, %34, %cst_21 {dimension_numbers = #tpu.dot_dimension_numbers<[1], [0], [0], [1], [0, 0, 1, 1], [], []>} : vector<16x32xbf16>, vector<32x8xbf16>, vector<16x8xf32> -> vector<16x8xf32>
    %48 = arith.truncf %47 : vector<16x8xf32> to vector<16x8xbf16>
    %c0_22 = arith.constant 0 : index
    %c8 = arith.constant 8 : index
    %49 = vector.load %arg10[%c0_22, %c8] : memref<16x32xbf16, #tpu.memory_space<vmem>>, vector<16x8xbf16>
    tpu.vector_store %arg10[%c0_22, %c8], %48 {strides = array<i32>} : memref<16x32xbf16, #tpu.memory_space<vmem>>, vector<16x8xbf16>,
    %50 = vector.extract_strided_slice %6 {offsets = [0, 16], sizes = [16, 8], strides = [1, 1]} : vector<16x32xbf16> to vector<16x8xbf16>
    %51 = vector.extract_strided_slice %13 {offsets = [0, 16], sizes = [32, 8], strides = [1, 1]} : vector<32x64xbf16> to vector<32x8xbf16>
    %52 = vector.extract_strided_slice %13 {offsets = [0, 48], sizes = [32, 8], strides = [1, 1]} : vector<32x64xbf16> to vector<32x8xbf16>
    %cst_23 = arith.constant dense<0.000000e+00> : vector<16x32xf32>
    %53 = tpu.matmul %50, %51, %cst_23 {dimension_numbers = #tpu.dot_dimension_numbers<[1], [1], [0], [0], [0, 0, 1, 0], [], []>} : vector<16x8xbf16>, vector<32x8xbf16>, vector<16x32xf32> -> vector<16x32xf32>
    %cst_24 = arith.constant dense<0xFF800000> : vector<16xf32>
    %54 = vector.multi_reduction <maximumf>, %53, %cst_24 [1] : vector<16x32xf32> to vector<16xf32>
    %55 = vector.shape_cast %54 : vector<16xf32> to vector<16x1xf32>
    %56 = vector.broadcast %55 : vector<16x1xf32> to vector<16x32xf32>
    %57 = arith.subf %53, %56 : vector<16x32xf32>
    %58 = math.exp %57 : vector<16x32xf32>
    %cst_25 = arith.constant dense<0.000000e+00> : vector<16xf32>
    %59 = vector.multi_reduction <add>, %58, %cst_25 [1] : vector<16x32xf32> to vector<16xf32>
    %60 = vector.shape_cast %59 : vector<16xf32> to vector<16x1xf32>
    %61 = tpu.reciprocal %60 {approx = true} : vector<16x1xf32> -> vector<16x1xf32>
    %62 = vector.broadcast %61 : vector<16x1xf32> to vector<16x32xf32>
    %63 = arith.mulf %58, %62 : vector<16x32xf32>
    %64 = arith.truncf %63 : vector<16x32xf32> to vector<16x32xbf16>
    %cst_26 = arith.constant dense<0.000000e+00> : vector<16x8xf32>
    %65 = tpu.matmul %64, %52, %cst_26 {dimension_numbers = #tpu.dot_dimension_numbers<[1], [0], [0], [1], [0, 0, 1, 1], [], []>} : vector<16x32xbf16>, vector<32x8xbf16>, vector<16x8xf32> -> vector<16x8xf32>
    %66 = arith.truncf %65 : vector<16x8xf32> to vector<16x8xbf16>
    %c0_27 = arith.constant 0 : index
    %c16 = arith.constant 16 : index
    %67 = vector.load %arg10[%c0_27, %c16] : memref<16x32xbf16, #tpu.memory_space<vmem>>, vector<16x8xbf16>
    tpu.vector_store %arg10[%c0_27, %c16], %66 {strides = array<i32>} : memref<16x32xbf16, #tpu.memory_space<vmem>>, vector<16x8xbf16>,
    %68 = vector.extract_strided_slice %6 {offsets = [0, 24], sizes = [16, 8], strides = [1, 1]} : vector<16x32xbf16> to vector<16x8xbf16>
    %69 = vector.extract_strided_slice %13 {offsets = [0, 24], sizes = [32, 8], strides = [1, 1]} : vector<32x64xbf16> to vector<32x8xbf16>
    %70 = vector.extract_strided_slice %13 {offsets = [0, 56], sizes = [32, 8], strides = [1, 1]} : vector<32x64xbf16> to vector<32x8xbf16>
    %cst_28 = arith.constant dense<0.000000e+00> : vector<16x32xf32>
    %71 = tpu.matmul %68, %69, %cst_28 {dimension_numbers = #tpu.dot_dimension_numbers<[1], [1], [0], [0], [0, 0, 1, 0], [], []>} : vector<16x8xbf16>, vector<32x8xbf16>, vector<16x32xf32> -> vector<16x32xf32>
    %cst_29 = arith.constant dense<0xFF800000> : vector<16xf32>
    %72 = vector.multi_reduction <maximumf>, %71, %cst_29 [1] : vector<16x32xf32> to vector<16xf32>
    %73 = vector.shape_cast %72 : vector<16xf32> to vector<16x1xf32>
    %74 = vector.broadcast %73 : vector<16x1xf32> to vector<16x32xf32>
    %75 = arith.subf %71, %74 : vector<16x32xf32>
    %76 = math.exp %75 : vector<16x32xf32>
    %cst_30 = arith.constant dense<0.000000e+00> : vector<16xf32>
    %77 = vector.multi_reduction <add>, %76, %cst_30 [1] : vector<16x32xf32> to vector<16xf32>
    %78 = vector.shape_cast %77 : vector<16xf32> to vector<16x1xf32>
    %79 = tpu.reciprocal %78 {approx = true} : vector<16x1xf32> -> vector<16x1xf32>
    %80 = vector.broadcast %79 : vector<16x1xf32> to vector<16x32xf32>
    %81 = arith.mulf %76, %80 : vector<16x32xf32>
    %82 = arith.truncf %81 : vector<16x32xf32> to vector<16x32xbf16>
    %cst_31 = arith.constant dense<0.000000e+00> : vector<16x8xf32>
    %83 = tpu.matmul %82, %70, %cst_31 {dimension_numbers = #tpu.dot_dimension_numbers<[1], [0], [0], [1], [0, 0, 1, 1], [], []>} : vector<16x32xbf16>, vector<32x8xbf16>, vector<16x8xf32> -> vector<16x8xf32>
    %84 = arith.truncf %83 : vector<16x8xf32> to vector<16x8xbf16>
    %c0_32 = arith.constant 0 : index
    %c24 = arith.constant 24 : index
    %85 = vector.load %arg10[%c0_32, %c24] : memref<16x32xbf16, #tpu.memory_space<vmem>>, vector<16x8xbf16>
    tpu.vector_store %arg10[%c0_32, %c24], %84 {strides = array<i32>} : memref<16x32xbf16, #tpu.memory_space<vmem>>, vector<16x8xbf16>,
    %c0_33 = arith.constant 0 : index
    %c0_34 = arith.constant 0 : index
    %86 = vector.load %arg10[%c0_33, %c0_34] : memref<16x32xbf16, #tpu.memory_space<vmem>>, vector<16x32xbf16>
    %c0_35 = arith.constant 0 : index
    %c0_36 = arith.constant 0 : index
    %87 = vector.load %arg7[%c0_35, %c0_36] : memref<32x32xbf16, #tpu.memory_space<vmem>>, vector<32x32xbf16>
    %cst_37 = arith.constant dense<0.000000e+00> : vector<16x32xf32>
    %88 = tpu.matmul %86, %87, %cst_37 {dimension_numbers = #tpu.dot_dimension_numbers<[1], [0], [0], [1], [0, 0, 1, 1], [], []>} : vector<16x32xbf16>, vector<32x32xbf16>, vector<16x32xf32> -> vector<16x32xf32>
    %c0_38 = arith.constant 0 : index
    %c0_39 = arith.constant 0 : index
    %89 = vector.load %arg8[%c0_38, %c0_39] : memref<1x32xf32, #tpu.memory_space<vmem>>, vector<1x32xf32>
    %90 = vector.broadcast %89 : vector<1x32xf32> to vector<16x32xf32>
    %91 = arith.addf %88, %90 : vector<16x32xf32>
    %92 = arith.truncf %91 : vector<16x32xf32> to vector<16x32xbf16>
    %c0_40 = arith.constant 0 : index
    %c0_41 = arith.constant 0 : index
    %93 = vector.load %arg9[%c0_40, %c0_41] : memref<16x32xbf16, #tpu.memory_space<vmem>>, vector<16x32xbf16>
    tpu.vector_store %arg9[%c0_40, %c0_41], %92 {strides = array<i32>} : memref<16x32xbf16, #tpu.memory_space<vmem>>, vector<16x32xbf16>,
    return
  }
  func.func @transform_0(%arg0: i32) -> (i32, i32) {
    %c0_i32 = arith.constant 0 : i32
    %c0_i32_0 = arith.constant 0 : i32
    return %arg0, %c0_i32 : i32, i32
  }
  func.func @transform_1(%arg0: i32) -> (i32, i32) {
    %c0_i32 = arith.constant 0 : i32
    %c0_i32_0 = arith.constant 0 : i32
    return %arg0, %c0_i32 : i32, i32
  }
  func.func @transform_2(%arg0: i32) -> (i32, i32) {
    %c0_i32 = arith.constant 0 : i32
    %c0_i32_0 = arith.constant 0 : i32
    %c0_i32_1 = arith.constant 0 : i32
    return %c0_i32, %c0_i32_0 : i32, i32
  }
  func.func @transform_3(%arg0: i32) -> (i32, i32) {
    %c0_i32 = arith.constant 0 : i32
    %c0_i32_0 = arith.constant 0 : i32
    %c0_i32_1 = arith.constant 0 : i32
    return %c0_i32, %c0_i32_0 : i32, i32
  }
  func.func @transform_4(%arg0: i32) -> (i32, i32) {
    %c0_i32 = arith.constant 0 : i32
    %c0_i32_0 = arith.constant 0 : i32
    %c0_i32_1 = arith.constant 0 : i32
    return %c0_i32, %c0_i32_0 : i32, i32
  }
  func.func @transform_5(%arg0: i32) -> (i32, i32) {
    %c0_i32 = arith.constant 0 : i32
    %c0_i32_0 = arith.constant 0 : i32
    %c0_i32_1 = arith.constant 0 : i32
    return %c0_i32, %c0_i32_0 : i32, i32
  }
  func.func @transform_6(%arg0: i32) -> (i32, i32) {
    %c0_i32 = arith.constant 0 : i32
    %c0_i32_0 = arith.constant 0 : i32
    %c0_i32_1 = arith.constant 0 : i32
    return %c0_i32, %c0_i32_0 : i32, i32
  }
  func.func @transform_7(%arg0: i32) -> (i32, i32) {
    %c0_i32 = arith.constant 0 : i32
    %c0_i32_0 = arith.constant 0 : i32
    %c0_i32_1 = arith.constant 0 : i32
    return %c0_i32, %c0_i32_0 : i32, i32
  }
  func.func @transform_8(%arg0: i32) -> (i32, i32) {
    %c0_i32 = arith.constant 0 : i32
    %c0_i32_0 = arith.constant 0 : i32
    return %arg0, %c0_i32 : i32, i32
  }
}

</mosaic_0001>

<llo_original>
// kernel: cross_attention_pallas.1
$region0: #{cross_attention_pallas.1}
  #allocation0 [shape = 'u32[]', space=smem, size = 0x4, offset = 0x4, fixed_abs, tag = 'smem constant byte address 0x4 - core index']
  #allocation1 [shape = 'u32[144,128]{1,0:T(1,128)}', space=vmem, size = 0x12000, scoped, tag = 'internal scratch']
  #allocation2 [shape = 'bf16[16,32]{1,0:T(8,128)(2,1)}', space=vmem, size = 0x1000, scoped, tag = 'scratch operand']
  %s0 = inlined_call_operand.vmem [shape: bf16[32,32], index: 0, kind: input, shape index: {}]
  %s1 = inlined_call_operand.vmem [shape: bf16[64,32], index: 1, kind: input, shape index: {}]
  %s2 = inlined_call_operand.vmem [shape: bf16[32,32], index: 2, kind: input, shape index: {}]
  %s3 = inlined_call_operand.vmem [shape: f32[1,32], index: 3, kind: input, shape index: {}]
  %s4 = inlined_call_operand.vmem [shape: bf16[32,64], index: 4, kind: input, shape index: {}]
  %s5 = inlined_call_operand.vmem [shape: f32[1,64], index: 5, kind: input, shape index: {}]
  %s6 = inlined_call_operand.vmem [shape: bf16[32,32], index: 6, kind: input, shape index: {}]
  %s7 = inlined_call_operand.vmem [shape: f32[1,32], index: 7, kind: input, shape index: {}]
  %s8 = inlined_call_operand.hbm [shape: bf16[32,32], index: 8, kind: output, shape index: {}]
  %s9 = sld [smem:[#allocation0]]
  $region65: #{cross_attention_pallas.1} parent=0
    _
  %s11 = ssub.s32 1, %s9
  %s12 = scalar_select 0, %s11, %s9
  $region1: #{cross_attention_pallas.1} parent=0
    #allocation3 [shape = 'u8[8192]{0}', space=vmem, size = 0x2000, scoped, tag = 'output window, operand 0']
    #allocation4 [shape = 's32[2]{0}', space=sflag, size = 0x8, scoped, tag = 'scoped memory for cross_attention_pallas.1']
    %13 = vsyncpa [#allocation4], 0
    %s14 = scalar_lea.sflag [#allocation4], 1
    %15 = vsyncpa %s14, 0
    loop: start=0, step=1, limit=4
    $region2: #{cross_attention_pallas.1} parent=1 // loop_pre_header
      _
    $region3: #{cross_attention_pallas.1} parent=1 // loop_header
      %s17 = sphi 0, %s21
      %p18 = scmp.ge.s32.totalorder %s17, 4
      %s27 = sphi 0, %s29
      %s30 = sphi 0, %s27
      %s31 = sphi 0, %s30
      %s47 = sphi 0, %s31
      %s53 = sphi 0, %s55
      %s56 = sphi 0, %s53
      %s57 = sphi 0, %s56
      %s73 = sphi 0, %s57
      %s77 = sphi 0, %s77
      %s79 = sphi 0, %s77
      %s80 = sphi 0, %s79
      %s94 = sphi 0, %s80
      %s98 = sphi 0, %s98
      %s100 = sphi 0, %s98
      %s101 = sphi 0, %s100
      %s115 = sphi 0, %s101
      %s119 = sphi 0, %s119
      %s121 = sphi 0, %s119
      %s122 = sphi 0, %s121
      %s136 = sphi 0, %s122
      %s140 = sphi 0, %s140
      %s142 = sphi 0, %s140
      %s143 = sphi 0, %s142
      %s157 = sphi 0, %s143
      %s161 = sphi 0, %s161
      %s163 = sphi 0, %s161
      %s164 = sphi 0, %s163
      %s178 = sphi 0, %s164
      %s182 = sphi 0, %s182
      %s184 = sphi 0, %s182
      %s185 = sphi 0, %s184
      %s199 = sphi 0, %s185
      %s205 = sphi 0, %s207
      %s208 = sphi 0, %s205
      %s209 = sphi 0, %s208
      %s225 = sphi 0, %s209
    $region4: #{cross_attention_pallas.1} parent=1 // loop_header_branch
      %20 = sbr.rel (%p18) target = $region8
    $region5: #{cross_attention_pallas.1} parent=1 // loop_body
      %s22 = ssub.s32 %s17, 1
      %s23 = ssub.s32 %s17, 2
      %s24 = sadd.s32 %s17, 1
      %s25 = ssub.s32 %s17, %s24
      %p26 = scmp.eq.s32.totalorder %s25, 0
      %s28 = sadd.s32 %s27, 1
      %s29 = scalar_select %p26, %s27, %s28
      %p32 = pneg %p26
      %p33 = scmp.eq.s32.totalorder %s17, 1
      %p34 = por %p32, %p33
      %p35 = scmp.ne.s32.totalorder %s27, %s30
      %p36 = scmp.eq.s32.totalorder %s17, 0
      %p37 = por %p35, %p36
      %p38 = scmp.ne.s32.totalorder %s27, %s30
      %p39 = scmp.eq.s32.totalorder %s22, 1
      %p40 = por %p38, %p39
      %p41 = scmp.ne.s32.totalorder %s30, %s31
      %p42 = scmp.eq.s32.totalorder %s22, 0
      %p43 = por %p41, %p42
      %p44 = scmp.ne.s32.totalorder %s30, %s31
      %p45 = scmp.eq.s32.totalorder %s23, 1
      %p46 = por %p44, %p45
      %p48 = scmp.ne.s32.totalorder %s31, %s47
      %p49 = scmp.eq.s32.totalorder %s23, 0
      %p50 = por %p48, %p49
      %s51 = ssub.s32 %s17, %s24
      %p52 = scmp.eq.s32.totalorder %s51, 0
      %s54 = sadd.s32 %s53, 1
      %s55 = scalar_select %p52, %s53, %s54
      %p58 = pneg %p52
      %p59 = scmp.eq.s32.totalorder %s17, 1
      %p60 = por %p58, %p59
      %p61 = scmp.ne.s32.totalorder %s53, %s56
      %p62 = scmp.eq.s32.totalorder %s17, 0
      %p63 = por %p61, %p62
      %p64 = scmp.ne.s32.totalorder %s53, %s56
      %p65 = scmp.eq.s32.totalorder %s22, 1
      %p66 = por %p64, %p65
      %p67 = scmp.ne.s32.totalorder %s56, %s57
      %p68 = scmp.eq.s32.totalorder %s22, 0
      %p69 = por %p67, %p68
      %p70 = scmp.ne.s32.totalorder %s56, %s57
      %p71 = scmp.eq.s32.totalorder %s23, 1
      %p72 = por %p70, %p71
      %p74 = scmp.ne.s32.totalorder %s57, %s73
      %p75 = scmp.eq.s32.totalorder %s23, 0
      %p76 = por %p74, %p75
      %s78 = sadd.s32 %s77, 1
      %p81 = scmp.eq.s32.totalorder %s17, 1
      %p82 = scmp.ne.s32.totalorder %s77, %s79
      %p83 = scmp.eq.s32.totalorder %s17, 0
      %p84 = por %p82, %p83
      %p85 = scmp.ne.s32.totalorder %s77, %s79
      %p86 = scmp.eq.s32.totalorder %s22, 1
      %p87 = por %p85, %p86
      %p88 = scmp.ne.s32.totalorder %s79, %s80
      %p89 = scmp.eq.s32.totalorder %s22, 0
      %p90 = por %p88, %p89
      %p91 = scmp.ne.s32.totalorder %s79, %s80
      %p92 = scmp.eq.s32.totalorder %s23, 1
      %p93 = por %p91, %p92
      %p95 = scmp.ne.s32.totalorder %s80, %s94
      %p96 = scmp.eq.s32.totalorder %s23, 0
      %p97 = por %p95, %p96
      %s99 = sadd.s32 %s98, 1
      %p102 = scmp.eq.s32.totalorder %s17, 1
      %p103 = scmp.ne.s32.totalorder %s98, %s100
      %p104 = scmp.eq.s32.totalorder %s17, 0
      %p105 = por %p103, %p104
      %p106 = scmp.ne.s32.totalorder %s98, %s100
      %p107 = scmp.eq.s32.totalorder %s22, 1
      %p108 = por %p106, %p107
      %p109 = scmp.ne.s32.totalorder %s100, %s101
      %p110 = scmp.eq.s32.totalorder %s22, 0
      %p111 = por %p109, %p110
      %p112 = scmp.ne.s32.totalorder %s100, %s101
      %p113 = scmp.eq.s32.totalorder %s23, 1
      %p114 = por %p112, %p113
      %p116 = scmp.ne.s32.totalorder %s101, %s115
      %p117 = scmp.eq.s32.totalorder %s23, 0
      %p118 = por %p116, %p117
      %s120 = sadd.s32 %s119, 1
      %p123 = scmp.eq.s32.totalorder %s17, 1
      %p124 = scmp.ne.s32.totalorder %s119, %s121
      %p125 = scmp.eq.s32.totalorder %s17, 0
      %p126 = por %p124, %p125
      %p127 = scmp.ne.s32.totalorder %s119, %s121
      %p128 = scmp.eq.s32.totalorder %s22, 1
      %p129 = por %p127, %p128
      %p130 = scmp.ne.s32.totalorder %s121, %s122
      %p131 = scmp.eq.s32.totalorder %s22, 0
      %p132 = por %p130, %p131
      %p133 = scmp.ne.s32.totalorder %s121, %s122
      %p134 = scmp.eq.s32.totalorder %s23, 1
      %p135 = por %p133, %p134
      %p137 = scmp.ne.s32.totalorder %s122, %s136
      %p138 = scmp.eq.s32.totalorder %s23, 0
      %p139 = por %p137, %p138
      %s141 = sadd.s32 %s140, 1
      %p144 = scmp.eq.s32.totalorder %s17, 1
      %p145 = scmp.ne.s32.totalorder %s140, %s142
      %p146 = scmp.eq.s32.totalorder %s17, 0
      %p147 = por %p145, %p146
      %p148 = scmp.ne.s32.totalorder %s140, %s142
      %p149 = scmp.eq.s32.totalorder %s22, 1
      %p150 = por %p148, %p149
      %p151 = scmp.ne.s32.totalorder %s142, %s143
      %p152 = scmp.eq.s32.totalorder %s22, 0
      %p153 = por %p151, %p152
      %p154 = scmp.ne.s32.totalorder %s142, %s143
      %p155 = scmp.eq.s32.totalorder %s23, 1
      %p156 = por %p154, %p155
      %p158 = scmp.ne.s32.totalorder %s143, %s157
      %p159 = scmp.eq.s32.totalorder %s23, 0
      %p160 = por %p158, %p159
      %s162 = sadd.s32 %s161, 1
      %p165 = scmp.eq.s32.totalorder %s17, 1
      %p166 = scmp.ne.s32.totalorder %s161, %s163
      %p167 = scmp.eq.s32.totalorder %s17, 0
      %p168 = por %p166, %p167
      %p169 = scmp.ne.s32.totalorder %s161, %s163
      %p170 = scmp.eq.s32.totalorder %s22, 1
      %p171 = por %p169, %p170
      %p172 = scmp.ne.s32.totalorder %s163, %s164
      %p173 = scmp.eq.s32.totalorder %s22, 0
      %p174 = por %p172, %p173
      %p175 = scmp.ne.s32.totalorder %s163, %s164
      %p176 = scmp.eq.s32.totalorder %s23, 1
      %p177 = por %p175, %p176
      %p179 = scmp.ne.s32.totalorder %s164, %s178
      %p180 = scmp.eq.s32.totalorder %s23, 0
      %p181 = por %p179, %p180
      %s183 = sadd.s32 %s182, 1
      %p186 = scmp.eq.s32.totalorder %s17, 1
      %p187 = scmp.ne.s32.totalorder %s182, %s184
      %p188 = scmp.eq.s32.totalorder %s17, 0
      %p189 = por %p187, %p188
      %p190 = scmp.ne.s32.totalorder %s182, %s184
      %p191 = scmp.eq.s32.totalorder %s22, 1
      %p192 = por %p190, %p191
      %p193 = scmp.ne.s32.totalorder %s184, %s185
      %p194 = scmp.eq.s32.totalorder %s22, 0
      %p195 = por %p193, %p194
      %p196 = scmp.ne.s32.totalorder %s184, %s185
      %p197 = scmp.eq.s32.totalorder %s23, 1
      %p198 = por %p196, %p197
      %p200 = scmp.ne.s32.totalorder %s185, %s199
      %p201 = scmp.eq.s32.totalorder %s23, 0
      %p202 = por %p200, %p201
      %s203 = ssub.s32 %s17, %s24
      %p204 = scmp.eq.s32.totalorder %s203, 0
      %s206 = sadd.s32 %s205, 1
      %s207 = scalar_select %p204, %s205, %s206
      %p210 = pneg %p204
      %p211 = scmp.eq.s32.totalorder %s17, 1
      %p212 = por %p210, %p211
      %p213 = scmp.ne.s32.totalorder %s205, %s208
      %p214 = scmp.eq.s32.totalorder %s17, 0
      %p215 = por %p213, %p214
      %p216 = scmp.ne.s32.totalorder %s205, %s208
      %p217 = scmp.eq.s32.totalorder %s22, 1
      %p218 = por %p216, %p217
      %p219 = scmp.ne.s32.totalorder %s208, %s209
      %p220 = scmp.eq.s32.totalorder %s22, 0
      %p221 = por %p219, %p220
      %p222 = scmp.ne.s32.totalorder %s208, %s209
      %p223 = scmp.eq.s32.totalorder %s23, 1
      %p224 = por %p222, %p223
      %p226 = scmp.ne.s32.totalorder %s209, %s225
      %p227 = scmp.eq.s32.totalorder %s23, 0
      %p228 = por %p226, %p227
      %p229 = scmp.le.s32.totalorder 1, %s17
      %p230 = scmp.lt.s32.totalorder %s17, 3
      %p231 = pnand %p229, %p230
      %p232 = pneg %p231
      // Predicated region
      $region9: #{cross_attention_pallas.1} parent=5 // pred_check
        _
      $region10: #{cross_attention_pallas.1} parent=5 // pred_check_branch
        %234 = sbr.rel (%p231) target = $region12
      $region11: #{cross_attention_pallas.1} parent=5 // pred_region
        %s235 = ssub.s32 %s17, 1
        // Predicated region
        $region13: #{cross_attention_pallas.1} parent=11 // pred_check
          %p236 = pneg %p90
        $region14: #{cross_attention_pallas.1} parent=11 // pred_check_branch
          %238 = sbr.rel (%p236) target = $region16
        $region15: #{cross_attention_pallas.1} parent=11 // pred_region
          _
        $region16: #{cross_attention_pallas.1} parent=11 // pred_fallthru
          _
        // Predicated region
        $region17: #{cross_attention_pallas.1} parent=11 // pred_check
          %p239 = pneg %p111
        $region18: #{cross_attention_pallas.1} parent=11 // pred_check_branch
          %241 = sbr.rel (%p239) target = $region20
        $region19: #{cross_attention_pallas.1} parent=11 // pred_region
          _
        $region20: #{cross_attention_pallas.1} parent=11 // pred_fallthru
          _
        // Predicated region
        $region21: #{cross_attention_pallas.1} parent=11 // pred_check
          %p242 = pneg %p132
        $region22: #{cross_attention_pallas.1} parent=11 // pred_check_branch
          %244 = sbr.rel (%p242) target = $region24
        $region23: #{cross_attention_pallas.1} parent=11 // pred_region
          _
        $region24: #{cross_attention_pallas.1} parent=11 // pred_fallthru
          _
        // Predicated region
        $region25: #{cross_attention_pallas.1} parent=11 // pred_check
          %p245 = pneg %p153
        $region26: #{cross_attention_pallas.1} parent=11 // pred_check_branch
          %247 = sbr.rel (%p245) target = $region28
        $region27: #{cross_attention_pallas.1} parent=11 // pred_region
          _
        $region28: #{cross_attention_pallas.1} parent=11 // pred_fallthru
          _
        // Predicated region
        $region29: #{cross_attention_pallas.1} parent=11 // pred_check
          %p248 = pneg %p174
        $region30: #{cross_attention_pallas.1} parent=11 // pred_check_branch
          %250 = sbr.rel (%p248) target = $region32
        $region31: #{cross_attention_pallas.1} parent=11 // pred_region
          _
        $region32: #{cross_attention_pallas.1} parent=11 // pred_fallthru
          _
        // Predicated region
        $region33: #{cross_attention_pallas.1} parent=11 // pred_check
          %p251 = pneg %p195
        $region34: #{cross_attention_pallas.1} parent=11 // pred_check_branch
          %253 = sbr.rel (%p251) target = $region36
        $region35: #{cross_attention_pallas.1} parent=11 // pred_region
          _
        $region36: #{cross_attention_pallas.1} parent=11 // pred_fallthru
          _
      $region12: #{cross_attention_pallas.1} parent=5 // pred_fallthru
        _
      %p254 = scmp.lt.s32.totalorder %s17, 2
      // Predicated region
      $region37: #{cross_attention_pallas.1} parent=5 // pred_check
        %p255 = pneg %p254
      $region38: #{cross_attention_pallas.1} parent=5 // pred_check_branch
        %257 = sbr.rel (%p255) target = $region40
      $region39: #{cross_attention_pallas.1} parent=5 // pred_region
        // Predicated region
        $region41: #{cross_attention_pallas.1} parent=39 // pred_check
          %p258 = pneg %p37
        $region42: #{cross_attention_pallas.1} parent=39 // pred_check_branch
          %260 = sbr.rel (%p258) target = $region44
        $region43: #{cross_attention_pallas.1} parent=39 // pred_region
          %s261 = smul.u32 2, %s17
          %p262 = scmp.lt.s32.totalorder %s261, 3
          %s263 = scalar_select %p262, %s261, 3
          %s264 = smul.addr %s263, 4
          %s265 = scalar_lea.vmem %s0, %s264
          %s266 = smul.u32 2, %s17
        $region44: #{cross_attention_pallas.1} parent=39 // pred_fallthru
          _
        // Predicated region
        $region45: #{cross_attention_pallas.1} parent=39 // pred_check
          %p267 = pneg %p63
        $region46: #{cross_attention_pallas.1} parent=39 // pred_check_branch
          %269 = sbr.rel (%p267) target = $region48
        $region47: #{cross_attention_pallas.1} parent=39 // pred_region
          %s270 = smul.u32 4, %s17
          %p271 = scmp.lt.s32.totalorder %s270, 7
          %s272 = scalar_select %p271, %s270, 7
          %s273 = smul.addr %s272, 4
          %s274 = scalar_lea.vmem %s1, %s273
          %s275 = smul.u32 4, %s17
        $region48: #{cross_attention_pallas.1} parent=39 // pred_fallthru
          _
      $region40: #{cross_attention_pallas.1} parent=5 // pred_fallthru
        _
      %p276 = scmp.le.s32.totalorder 1, %s17
      %p277 = scmp.lt.s32.totalorder %s17, 3
      %p278 = pnand %p276, %p277
      %p279 = pneg %p278
      // Predicated region
      $region49: #{cross_attention_pallas.1} parent=5 // pred_check
        _
      $region50: #{cross_attention_pallas.1} parent=5 // pred_check_branch
        %281 = sbr.rel (%p278) target = $region52
      $region51: #{cross_attention_pallas.1} parent=5 // pred_region
        %s282 = ssub.s32 %s17, 1
        %s283 = smul.u32 2, %s22
        %p284 = scmp.lt.s32.totalorder %s283, 3
        %s285 = scalar_select %p284, %s283, 3
        %s286 = smul.addr %s285, 4
        %s287 = scalar_lea.vmem %s0, %s286
        %p288 = pneg %p43
        %p289 = pneg %p40
        %s290 = smul.u32 4, %s22
        %p291 = scmp.lt.s32.totalorder %s290, 7
        %s292 = scalar_select %p291, %s290, 7
        %s293 = smul.addr %s292, 4
        %s294 = scalar_lea.vmem %s1, %s293
        %p295 = pneg %p69
        %p296 = pneg %p66
        %p297 = pneg %p90
        %p298 = pneg %p87
        %p299 = pneg %p111
        %p300 = pneg %p108
        %p301 = pneg %p132
        %p302 = pneg %p129
        %p303 = pneg %p153
        %p304 = pneg %p150
        %p305 = pneg %p174
        %p306 = pneg %p171
        %p307 = pneg %p195
        %p308 = pneg %p192
        %p309 = pneg %p221
        %p310 = pneg %p218
        %s311 = sand.u32 %s208, 1
        %s312 = scalar_lea.sflag [#allocation4], %s311
        %s313 = sand.u32 %s208, 1
        %s314 = smul.addr %s313, 8
        %s315 = scalar_lea.vmem [#allocation3], %s314
        %s316 = smul.u32 2, %s22
        %p317 = scmp.lt.s32.totalorder %s316, 3
        %s318 = scalar_select %p317, %s316, 3
        %s319 = smul.addr %s318, 4
        %s320 = scalar_lea.vmem %s0, %s319
        %s321 = smul.u32 2, %s22
        %s322 = smul.u32 4, %s22
        %p323 = scmp.lt.s32.totalorder %s322, 7
        %s324 = scalar_select %p323, %s322, 7
        %s325 = smul.addr %s324, 4
        %s326 = scalar_lea.vmem %s1, %s325
        %s327 = smul.u32 4, %s22
        %s328 = smul.u32 2, %s22
        %v330 = vld [vmem:[%s320] sm:$0xf]
        %v331 = vld [vmem:[%s320 + $0x4] sm:$0xf]
        %v332 = vld [vmem:[%s2] sm:$0xf]
        %v333 = vld [vmem:[%s2 + $0x4] sm:$0xf]
        %v334 = vld [vmem:[%s2 + $0x8] sm:$0xf]
        %v335 = vld [vmem:[%s2 + $0xc] sm:$0xf]
        %v336 = vld [vmem:[%s3] sm:$0x1]
        %v338 = vlaneseq
        %v339 = vshrl.u32 %v338, 7
        %v340 = vsub.s32 0, %v339
        %v341 = vrot.slane %v336, %v340
        %v345 = vunpack.c.l.b16 %v330
        %v346 = vunpack.c.l.b16 %v331
        %v347 = vpack.c.b16 %v346, %v345
        %v352 = vunpack.c.l.b16 %v332
        %v353 = vunpack.c.l.b16 %v333
        %v354 = vunpack.c.l.b16 %v334
        %v355 = vunpack.c.l.b16 %v335
        %v356 = vpack.c.b16 %v353, %v352
        %v357 = vpack.c.b16 %v355, %v354
        %vm360 = vcmask 261120
        %v362 = vsel %vm360, %v347, 0
        %364 = vmatprep.subr.bf16.mxu0 0
        %365 = vmatpush1.bf16.msra.mxu0 0
        %366 = vmatprep.subr.bf16.mxu0 0
        %367 = vmatpush1.bf16.msra.mxu0 0
        %368 = vmatprep.subr.bf16.mxu0 0
        %369 = vmatpush1.bf16.msra.mxu0 0
        %370 = vmatprep.subr.bf16.mxu0 0
        %371 = vmatpush1.bf16.msra.mxu0 0
        %372 = vmatprep.subr.bf16.mxu0 0
        %373 = vmatpush1.bf16.msra.mxu0 0
        %374 = vmatprep.subr.bf16.mxu0 0
        %375 = vmatpush1.bf16.msra.mxu0 0
        %376 = vmatprep.subr.bf16.mxu0 0
        %377 = vmatpush1.bf16.msra.mxu0 %v357
        %378 = vmatprep.subr.bf16.mxu0 0
        %379 = vmatpush1.bf16.msra.mxu0 %v356
        %380 = vmatprep.subr.bf16.mxu0 0
        %381 = vmatpush2.bf16.msra.mxu0 0
        %382 = vmatprep.subr.bf16.mxu0 0
        %383 = vmatpush2.bf16.msra.mxu0 0
        %384 = vmatprep.subr.bf16.mxu0 0
        %385 = vmatpush2.bf16.msra.mxu0 0
        %386 = vmatprep.subr.bf16.mxu0 0
        %387 = vmatpush2.bf16.msra.mxu0 0
        %388 = vmatprep.subr.bf16.mxu0 0
        %389 = vmatpush2.bf16.msra.mxu0 0
        %390 = vmatprep.subr.bf16.mxu0 0
        %391 = vmatpush2.bf16.msra.mxu0 0
        %392 = vmatprep.subr.bf16.mxu0 0
        %393 = vmatpush2.bf16.msra.mxu0 0
        %394 = vmatprep.subr.bf16.mxu0 0
        %395 = vmatpush2.bf16.msra.mxu0 0
        %396 = vmatprep.mubr.bf16.mxu0 0
        %397 = vmatmul.mubr.bf16.gmra.mxu0 %v362
        %v398 = vpop.f32.mrf.mxu0
        %v399 = vadd.f32 %v341, %v398
        %v400 = vpop.f32.mrf.mxu0
        %v401 = vpop.f32.mrf.mxu0
        %v402 = vadd.f32 %v341, %v401
        %v403 = vpop.f32.mrf.mxu0
        %404 = vdwg.mxu0
        %v405 = vpack.c.bf16 %v402, %v399
        %v406 = vld [vmem:[%s326] sm:$0xf]
        %v407 = vld [vmem:[%s326 + $0x4] sm:$0xf]
        %v408 = vld [vmem:[%s326 + $0x8] sm:$0xf]
        %v409 = vld [vmem:[%s326 + $0xc] sm:$0xf]
        %v410 = vld [vmem:[%s4] sm:$0xf]
        %v411 = vld [vmem:[%s4 + $0x4] sm:$0xf]
        %v412 = vld [vmem:[%s4 + $0x8] sm:$0xf]
        %v413 = vld [vmem:[%s4 + $0xc] sm:$0xf]
        %v414 = vld [vmem:[%s5] sm:$0x1]
        %v416 = vlaneseq
        %v417 = vshrl.u32 %v416, 7
        %v418 = vsub.s32 0, %v417
        %v419 = vrot.slane %v414, %v418
        %v425 = vunpack.c.l.b16 %v406
        %v426 = vunpack.c.l.b16 %v407
        %v427 = vunpack.c.l.b16 %v408
        %v428 = vunpack.c.l.b16 %v409
        %v429 = vpack.c.b16 %v426, %v425
        %v430 = vpack.c.b16 %v428, %v427
        %v435 = vunpack.c.l.b16 %v410
        %v436 = vunpack.c.l.b16 %v411
        %v437 = vunpack.c.l.b16 %v412
        %v438 = vunpack.c.l.b16 %v413
        %v439 = vpack.c.b16 %v436, %v435
        %v440 = vpack.c.b16 %v438, %v437
        %v444 = vsel %vm360, %v429, 0
        %v447 = vsel %vm360, %v430, 0
        %449 = vmatprep.subr.bf16.mxu0 0
        %450 = vmatpush1.bf16.msra.mxu0 0
        %451 = vmatprep.subr.bf16.mxu0 0
        %452 = vmatpush1.bf16.msra.mxu0 0
        %453 = vmatprep.subr.bf16.mxu0 0
        %454 = vmatpush1.bf16.msra.mxu0 0
        %455 = vmatprep.subr.bf16.mxu0 0
        %456 = vmatpush1.bf16.msra.mxu0 0
        %457 = vmatprep.subr.bf16.mxu0 0
        %458 = vmatpush1.bf16.msra.mxu0 0
        %459 = vmatprep.subr.bf16.mxu0 0
        %460 = vmatpush1.bf16.msra.mxu0 0
        %461 = vmatprep.subr.bf16.mxu0 0
        %462 = vmatpush1.bf16.msra.mxu0 %v440
        %463 = vmatprep.subr.bf16.mxu0 0
        %464 = vmatpush1.bf16.msra.mxu0 %v439
        %465 = vmatprep.subr.bf16.mxu0 0
        %466 = vmatpush2.bf16.msra.mxu0 0
        %467 = vmatprep.subr.bf16.mxu0 0
        %468 = vmatpush2.bf16.msra.mxu0 0
        %469 = vmatprep.subr.bf16.mxu0 0
        %470 = vmatpush2.bf16.msra.mxu0 0
        %471 = vmatprep.subr.bf16.mxu0 0
        %472 = vmatpush2.bf16.msra.mxu0 0
        %473 = vmatprep.subr.bf16.mxu0 0
        %474 = vmatpush2.bf16.msra.mxu0 0
        %475 = vmatprep.subr.bf16.mxu0 0
        %476 = vmatpush2.bf16.msra.mxu0 0
        %477 = vmatprep.subr.bf16.mxu0 0
        %478 = vmatpush2.bf16.msra.mxu0 0
        %479 = vmatprep.subr.bf16.mxu0 0
        %480 = vmatpush2.bf16.msra.mxu0 0
        %481 = vmatprep.mubr.bf16.mxu0 0
        %482 = vmatmul.mubr.bf16.gmra.mxu0 %v444
        %v483 = vpop.f32.mrf.mxu0
        %v484 = vadd.f32 %v419, %v483
        %v485 = vpop.f32.mrf.mxu0
        %v486 = vpop.f32.mrf.mxu0
        %v487 = vadd.f32 %v419, %v486
        %v488 = vpop.f32.mrf.mxu0
        %489 = vmatprep.mubr.bf16.mxu0 0
        %490 = vmatmul.mubr.bf16.gmra.mxu0 %v447
        %v491 = vpop.f32.mrf.mxu0
        %v492 = vadd.f32 %v419, %v491
        %v493 = vpop.f32.mrf.mxu0
        %v494 = vpop.f32.mrf.mxu0
        %v495 = vadd.f32 %v419, %v494
        %v496 = vpop.f32.mrf.mxu0
        %497 = vdwg.mxu0
        %v498 = vpack.c.bf16 %v487, %v484
        %v499 = vpack.c.bf16 %v495, %v492
        %vm500 = vcmask 64512
        %v502 = vsel %vm500, %v405, 0
        %v505 = vsel %vm500, %v498, 0
        %v508 = vsel %vm500, %v499, 0
        %510 = vmatprep.subr.bf16.mxu0 0
        %511 = vmatpush1.bf16.xpose.msra.mxu0 0
        %512 = vmatprep.subr.bf16.mxu0 0
        %513 = vmatpush1.bf16.xpose.msra.mxu0 0
        %514 = vmatprep.subr.bf16.mxu0 0
        %515 = vmatpush1.bf16.xpose.msra.mxu0 0
        %516 = vmatprep.subr.bf16.mxu0 0
        %517 = vmatpush1.bf16.xpose.msra.mxu0 0
        %518 = vmatprep.subr.bf16.mxu0 0
        %519 = vmatpush1.bf16.xpose.msra.mxu0 0
        %520 = vmatprep.subr.bf16.mxu0 0
        %521 = vmatpush1.bf16.xpose.msra.mxu0 0
        %522 = vmatprep.subr.bf16.mxu0 0
        %523 = vmatpush1.bf16.xpose.msra.mxu0 %v508
        %524 = vmatprep.subr.bf16.mxu0 0
        %525 = vmatpush1.bf16.xpose.msra.mxu0 %v505
        %526 = vmatprep.subr.bf16.mxu0 0
        %527 = vmatpush2.bf16.xpose.msra.mxu0 0
        %528 = vmatprep.subr.bf16.mxu0 0
        %529 = vmatpush2.bf16.xpose.msra.mxu0 0
        %530 = vmatprep.subr.bf16.mxu0 0
        %531 = vmatpush2.bf16.xpose.msra.mxu0 0
        %532 = vmatprep.subr.bf16.mxu0 0
        %533 = vmatpush2.bf16.xpose.msra.mxu0 0
        %534 = vmatprep.subr.bf16.mxu0 0
        %535 = vmatpush2.bf16.xpose.msra.mxu0 0
        %536 = vmatprep.subr.bf16.mxu0 0
        %537 = vmatpush2.bf16.xpose.msra.mxu0 0
        %538 = vmatprep.subr.bf16.mxu0 0
        %539 = vmatpush2.bf16.xpose.msra.mxu0 0
        %540 = vmatprep.subr.bf16.mxu0 0
        %541 = vmatpush2.bf16.xpose.msra.mxu0 0
        %542 = vmatprep.mubr.bf16.mxu0 0
        %543 = vmatmul.mubr.bf16.gmra.mxu0 %v502
        %v544 = vpop.f32.mrf.mxu0
        %v545 = vadd.f32 0.0, %v544
        %v546 = vpop.f32.mrf.mxu0
        %v547 = vpop.f32.mrf.mxu0
        %v548 = vadd.f32 0.0, %v547
        %v549 = vpop.f32.mrf.mxu0
        %550 = vdwg.mxu0
        %v551 = vsel %vm360, %v545, -inf
        %552 = vmax.xlane.f32.xlu0 %v551
        %v553 = vpop.xlane.xlu0 %552
        %v554 = vsel %vm360, %v548, -inf
        %555 = vmax.xlane.f32.xlu0 %v554
        %v556 = vpop.xlane.xlu0 %555
        %v557 = vsub.f32 %v545, %v553
        %v558 = vsub.f32 %v548, %v556
        %v559 = vmul.f32 %v557, 1.442695
        %v560 = vpow.pop %v559
        %v561 = vmul.f32 %v558, 1.442695
        %v562 = vpow.pop %v561
        %v563 = vsel %vm360, %v560, 0.0
        %564 = vadd.xlane.f32.xlu0 %v563
        %v565 = vpop.xlane.xlu0 %564
        %v566 = vsel %vm360, %v562, 0.0
        %567 = vadd.xlane.f32.xlu0 %v566
        %v568 = vpop.xlane.xlu0 %567
        %v569 = vrcp.pop %v565
        %v570 = vrcp.pop %v568
        %v571 = vmul.f32 %v560, %v569
        %v572 = vmul.f32 %v562, %v570
        %v573 = vpack.c.bf16 %v572, %v571
        %576 = vrot.lane.b32.xlu0 %v498, 96
        %v577 = vpop.permute.xlu0 %576
        %578 = vrot.lane.b32.xlu0 %v499, 96
        %v579 = vpop.permute.xlu0 %578
        %v583 = vsel %vm360, %v573, 0
        %585 = vmatprep.subr.bf16.mxu0 0
        %586 = vmatpush1.bf16.msra.mxu0 0
        %587 = vmatprep.subr.bf16.mxu0 0
        %588 = vmatpush1.bf16.msra.mxu0 0
        %589 = vmatprep.subr.bf16.mxu0 0
        %590 = vmatpush1.bf16.msra.mxu0 0
        %591 = vmatprep.subr.bf16.mxu0 0
        %592 = vmatpush1.bf16.msra.mxu0 0
        %593 = vmatprep.subr.bf16.mxu0 0
        %594 = vmatpush1.bf16.msra.mxu0 0
        %595 = vmatprep.subr.bf16.mxu0 0
        %596 = vmatpush1.bf16.msra.mxu0 0
        %597 = vmatprep.subr.bf16.mxu0 0
        %598 = vmatpush1.bf16.msra.mxu0 %v579
        %599 = vmatprep.subr.bf16.mxu0 0
        %600 = vmatpush1.bf16.msra.mxu0 %v577
        %601 = vmatprep.subr.bf16.mxu0 0
        %602 = vmatpush2.bf16.msra.mxu0 0
        %603 = vmatprep.subr.bf16.mxu0 0
        %604 = vmatpush2.bf16.msra.mxu0 0
        %605 = vmatprep.subr.bf16.mxu0 0
        %606 = vmatpush2.bf16.msra.mxu0 0
        %607 = vmatprep.subr.bf16.mxu0 0
        %608 = vmatpush2.bf16.msra.mxu0 0
        %609 = vmatprep.subr.bf16.mxu0 0
        %610 = vmatpush2.bf16.msra.mxu0 0
        %611 = vmatprep.subr.bf16.mxu0 0
        %612 = vmatpush2.bf16.msra.mxu0 0
        %613 = vmatprep.subr.bf16.mxu0 0
        %614 = vmatpush2.bf16.msra.mxu0 0
        %615 = vmatprep.subr.bf16.mxu0 0
        %616 = vmatpush2.bf16.msra.mxu0 0
        %617 = vmatprep.mubr.bf16.mxu0 0
        %618 = vmatmul.mubr.bf16.gmra.mxu0 %v583
        %v619 = vpop.f32.mrf.mxu0
        %v620 = vadd.f32 0.0, %v619
        %v621 = vpop.f32.mrf.mxu0
        %v622 = vpop.f32.mrf.mxu0
        %v623 = vadd.f32 0.0, %v622
        %v624 = vpop.f32.mrf.mxu0
        %625 = vdwg.mxu0
        %v626 = vpack.c.bf16 %v623, %v620
        %v628 = vunpack.c.l.b16 %v626
        %v629 = vunpack.c.h.b16 %v626
        %v630 = vpack.c.b16 %v628, %v628
        %v631 = vpack.c.b16 %v629, %v629
        %vm634 = vcmask 60416
        %635 = vst.msk [vmem:[#allocation2] sm:$0xf] %vm634, %v630
        %636 = vst.msk [vmem:[#allocation2 + $0x4] sm:$0xf] %vm634, %v631
        %638 = vrot.lane.b32.xlu0 %v405, 120
        %v639 = vpop.permute.xlu0 %638
        %640 = vrot.lane.b32.xlu0 %v498, 120
        %v641 = vpop.permute.xlu0 %640
        %642 = vrot.lane.b32.xlu0 %v499, 120
        %v643 = vpop.permute.xlu0 %642
        %v645 = vsel %vm500, %v639, 0
        %v648 = vsel %vm500, %v641, 0
        %v651 = vsel %vm500, %v643, 0
        %653 = vmatprep.subr.bf16.mxu0 0
        %654 = vmatpush1.bf16.xpose.msra.mxu0 0
        %655 = vmatprep.subr.bf16.mxu0 0
        %656 = vmatpush1.bf16.xpose.msra.mxu0 0
        %657 = vmatprep.subr.bf16.mxu0 0
        %658 = vmatpush1.bf16.xpose.msra.mxu0 0
        %659 = vmatprep.subr.bf16.mxu0 0
        %660 = vmatpush1.bf16.xpose.msra.mxu0 0
        %661 = vmatprep.subr.bf16.mxu0 0
        %662 = vmatpush1.bf16.xpose.msra.mxu0 0
        %663 = vmatprep.subr.bf16.mxu0 0
        %664 = vmatpush1.bf16.xpose.msra.mxu0 0
        %665 = vmatprep.subr.bf16.mxu0 0
        %666 = vmatpush1.bf16.xpose.msra.mxu0 %v651
        %667 = vmatprep.subr.bf16.mxu0 0
        %668 = vmatpush1.bf16.xpose.msra.mxu0 %v648
        %669 = vmatprep.subr.bf16.mxu0 0
        %670 = vmatpush2.bf16.xpose.msra.mxu0 0
        %671 = vmatprep.subr.bf16.mxu0 0
        %672 = vmatpush2.bf16.xpose.msra.mxu0 0
        %673 = vmatprep.subr.bf16.mxu0 0
        %674 = vmatpush2.bf16.xpose.msra.mxu0 0
        %675 = vmatprep.subr.bf16.mxu0 0
        %676 = vmatpush2.bf16.xpose.msra.mxu0 0
        %677 = vmatprep.subr.bf16.mxu0 0
        %678 = vmatpush2.bf16.xpose.msra.mxu0 0
        %679 = vmatprep.subr.bf16.mxu0 0
        %680 = vmatpush2.bf16.xpose.msra.mxu0 0
        %681 = vmatprep.subr.bf16.mxu0 0
        %682 = vmatpush2.bf16.xpose.msra.mxu0 0
        %683 = vmatprep.subr.bf16.mxu0 0
        %684 = vmatpush2.bf16.xpose.msra.mxu0 0
        %685 = vmatprep.mubr.bf16.mxu0 0
        %686 = vmatmul.mubr.bf16.gmra.mxu0 %v645
        %v687 = vpop.f32.mrf.mxu0
        %v688 = vadd.f32 0.0, %v687
        %v689 = vpop.f32.mrf.mxu0
        %v690 = vpop.f32.mrf.mxu0
        %v691 = vadd.f32 0.0, %v690
        %v692 = vpop.f32.mrf.mxu0
        %693 = vdwg.mxu0
        %v694 = vsel %vm360, %v688, -inf
        %695 = vmax.xlane.f32.xlu0 %v694
        %v696 = vpop.xlane.xlu0 %695
        %v697 = vsel %vm360, %v691, -inf
        %698 = vmax.xlane.f32.xlu0 %v697
        %v699 = vpop.xlane.xlu0 %698
        %v700 = vsub.f32 %v688, %v696
        %v701 = vsub.f32 %v691, %v699
        %v702 = vmul.f32 %v700, 1.442695
        %v703 = vpow.pop %v702
        %v704 = vmul.f32 %v701, 1.442695
        %v705 = vpow.pop %v704
        %v706 = vsel %vm360, %v703, 0.0
        %707 = vadd.xlane.f32.xlu0 %v706
        %v708 = vpop.xlane.xlu0 %707
        %v709 = vsel %vm360, %v705, 0.0
        %710 = vadd.xlane.f32.xlu0 %v709
        %v711 = vpop.xlane.xlu0 %710
        %v712 = vrcp.pop %v708
        %v713 = vrcp.pop %v711
        %v714 = vmul.f32 %v703, %v712
        %v715 = vmul.f32 %v705, %v713
        %v716 = vpack.c.bf16 %v715, %v714
        %717 = vrot.lane.b32.xlu0 %v498, 88
        %v718 = vpop.permute.xlu0 %717
        %719 = vrot.lane.b32.xlu0 %v499, 88
        %v720 = vpop.permute.xlu0 %719
        %v724 = vsel %vm360, %v716, 0
        %726 = vmatprep.subr.bf16.mxu0 0
        %727 = vmatpush1.bf16.msra.mxu0 0
        %728 = vmatprep.subr.bf16.mxu0 0
        %729 = vmatpush1.bf16.msra.mxu0 0
        %730 = vmatprep.subr.bf16.mxu0 0
        %731 = vmatpush1.bf16.msra.mxu0 0
        %732 = vmatprep.subr.bf16.mxu0 0
        %733 = vmatpush1.bf16.msra.mxu0 0
        %734 = vmatprep.subr.bf16.mxu0 0
        %735 = vmatpush1.bf16.msra.mxu0 0
        %736 = vmatprep.subr.bf16.mxu0 0
        %737 = vmatpush1.bf16.msra.mxu0 0
        %738 = vmatprep.subr.bf16.mxu0 0
        %739 = vmatpush1.bf16.msra.mxu0 %v720
        %740 = vmatprep.subr.bf16.mxu0 0
        %741 = vmatpush1.bf16.msra.mxu0 %v718
        %742 = vmatprep.subr.bf16.mxu0 0
        %743 = vmatpush2.bf16.msra.mxu0 0
        %744 = vmatprep.subr.bf16.mxu0 0
        %745 = vmatpush2.bf16.msra.mxu0 0
        %746 = vmatprep.subr.bf16.mxu0 0
        %747 = vmatpush2.bf16.msra.mxu0 0
        %748 = vmatprep.subr.bf16.mxu0 0
        %749 = vmatpush2.bf16.msra.mxu0 0
        %750 = vmatprep.subr.bf16.mxu0 0
        %751 = vmatpush2.bf16.msra.mxu0 0
        %752 = vmatprep.subr.bf16.mxu0 0
        %753 = vmatpush2.bf16.msra.mxu0 0
        %754 = vmatprep.subr.bf16.mxu0 0
        %755 = vmatpush2.bf16.msra.mxu0 0
        %756 = vmatprep.subr.bf16.mxu0 0
        %757 = vmatpush2.bf16.msra.mxu0 0
        %758 = vmatprep.mubr.bf16.mxu0 0
        %759 = vmatmul.mubr.bf16.gmra.mxu0 %v724
        %v760 = vpop.f32.mrf.mxu0
        %v761 = vadd.f32 0.0, %v760
        %v762 = vpop.f32.mrf.mxu0
        %v763 = vpop.f32.mrf.mxu0
        %v764 = vadd.f32 0.0, %v763
        %v765 = vpop.f32.mrf.mxu0
        %766 = vdwg.mxu0
        %v767 = vpack.c.bf16 %v764, %v761
        %v769 = vunpack.c.l.b16 %v767
        %v770 = vunpack.c.h.b16 %v767
        %v771 = vpack.c.b16 %v769, %v769
        %v772 = vpack.c.b16 %v770, %v770
        %773 = vrot.lane.b32.xlu0 %v771, 8
        %v774 = vpop.permute.xlu0 %773
        %775 = vrot.lane.b32.xlu0 %v772, 8
        %v776 = vpop.permute.xlu0 %775
        %vm779 = vcmask 126016
        %780 = vst.msk [vmem:[#allocation2] sm:$0xf] %vm779, %v774
        %781 = vst.msk [vmem:[#allocation2 + $0x4] sm:$0xf] %vm779, %v776
        %782 = vrot.lane.b32.xlu0 %v405, 112
        %v783 = vpop.permute.xlu0 %782
        %784 = vrot.lane.b32.xlu0 %v498, 112
        %v785 = vpop.permute.xlu0 %784
        %786 = vrot.lane.b32.xlu0 %v499, 112
        %v787 = vpop.permute.xlu0 %786
        %v789 = vsel %vm500, %v783, 0
        %v792 = vsel %vm500, %v785, 0
        %v795 = vsel %vm500, %v787, 0
        %797 = vmatprep.subr.bf16.mxu0 0
        %798 = vmatpush1.bf16.xpose.msra.mxu0 0
        %799 = vmatprep.subr.bf16.mxu0 0
        %800 = vmatpush1.bf16.xpose.msra.mxu0 0
        %801 = vmatprep.subr.bf16.mxu0 0
        %802 = vmatpush1.bf16.xpose.msra.mxu0 0
        %803 = vmatprep.subr.bf16.mxu0 0
        %804 = vmatpush1.bf16.xpose.msra.mxu0 0
        %805 = vmatprep.subr.bf16.mxu0 0
        %806 = vmatpush1.bf16.xpose.msra.mxu0 0
        %807 = vmatprep.subr.bf16.mxu0 0
        %808 = vmatpush1.bf16.xpose.msra.mxu0 0
        %809 = vmatprep.subr.bf16.mxu0 0
        %810 = vmatpush1.bf16.xpose.msra.mxu0 %v795
        %811 = vmatprep.subr.bf16.mxu0 0
        %812 = vmatpush1.bf16.xpose.msra.mxu0 %v792
        %813 = vmatprep.subr.bf16.mxu0 0
        %814 = vmatpush2.bf16.xpose.msra.mxu0 0
        %815 = vmatprep.subr.bf16.mxu0 0
        %816 = vmatpush2.bf16.xpose.msra.mxu0 0
        %817 = vmatprep.subr.bf16.mxu0 0
        %818 = vmatpush2.bf16.xpose.msra.mxu0 0
        %819 = vmatprep.subr.bf16.mxu0 0
        %820 = vmatpush2.bf16.xpose.msra.mxu0 0
        %821 = vmatprep.subr.bf16.mxu0 0
        %822 = vmatpush2.bf16.xpose.msra.mxu0 0
        %823 = vmatprep.subr.bf16.mxu0 0
        %824 = vmatpush2.bf16.xpose.msra.mxu0 0
        %825 = vmatprep.subr.bf16.mxu0 0
        %826 = vmatpush2.bf16.xpose.msra.mxu0 0
        %827 = vmatprep.subr.bf16.mxu0 0
        %828 = vmatpush2.bf16.xpose.msra.mxu0 0
        %829 = vmatprep.mubr.bf16.mxu0 0
        %830 = vmatmul.mubr.bf16.gmra.mxu0 %v789
        %v831 = vpop.f32.mrf.mxu0
        %v832 = vadd.f32 0.0, %v831
        %v833 = vpop.f32.mrf.mxu0
        %v834 = vpop.f32.mrf.mxu0
        %v835 = vadd.f32 0.0, %v834
        %v836 = vpop.f32.mrf.mxu0
        %837 = vdwg.mxu0
        %v838 = vsel %vm360, %v832, -inf
        %839 = vmax.xlane.f32.xlu0 %v838
        %v840 = vpop.xlane.xlu0 %839
        %v841 = vsel %vm360, %v835, -inf
        %842 = vmax.xlane.f32.xlu0 %v841
        %v843 = vpop.xlane.xlu0 %842
        %v844 = vsub.f32 %v832, %v840
        %v845 = vsub.f32 %v835, %v843
        %v846 = vmul.f32 %v844, 1.442695
        %v847 = vpow.pop %v846
        %v848 = vmul.f32 %v845, 1.442695
        %v849 = vpow.pop %v848
        %v850 = vsel %vm360, %v847, 0.0
        %851 = vadd.xlane.f32.xlu0 %v850
        %v852 = vpop.xlane.xlu0 %851
        %v853 = vsel %vm360, %v849, 0.0
        %854 = vadd.xlane.f32.xlu0 %v853
        %v855 = vpop.xlane.xlu0 %854
        %v856 = vrcp.pop %v852
        %v857 = vrcp.pop %v855
        %v858 = vmul.f32 %v847, %v856
        %v859 = vmul.f32 %v849, %v857
        %v860 = vpack.c.bf16 %v859, %v858
        %861 = vrot.lane.b32.xlu0 %v498, 80
        %v862 = vpop.permute.xlu0 %861
        %863 = vrot.lane.b32.xlu0 %v499, 80
        %v864 = vpop.permute.xlu0 %863
        %v868 = vsel %vm360, %v860, 0
        %870 = vmatprep.subr.bf16.mxu0 0
        %871 = vmatpush1.bf16.msra.mxu0 0
        %872 = vmatprep.subr.bf16.mxu0 0
        %873 = vmatpush1.bf16.msra.mxu0 0
        %874 = vmatprep.subr.bf16.mxu0 0
        %875 = vmatpush1.bf16.msra.mxu0 0
        %876 = vmatprep.subr.bf16.mxu0 0
        %877 = vmatpush1.bf16.msra.mxu0 0
        %878 = vmatprep.subr.bf16.mxu0 0
        %879 = vmatpush1.bf16.msra.mxu0 0
        %880 = vmatprep.subr.bf16.mxu0 0
        %881 = vmatpush1.bf16.msra.mxu0 0
        %882 = vmatprep.subr.bf16.mxu0 0
        %883 = vmatpush1.bf16.msra.mxu0 %v864
        %884 = vmatprep.subr.bf16.mxu0 0
        %885 = vmatpush1.bf16.msra.mxu0 %v862
        %886 = vmatprep.subr.bf16.mxu0 0
        %887 = vmatpush2.bf16.msra.mxu0 0
        %888 = vmatprep.subr.bf16.mxu0 0
        %889 = vmatpush2.bf16.msra.mxu0 0
        %890 = vmatprep.subr.bf16.mxu0 0
        %891 = vmatpush2.bf16.msra.mxu0 0
        %892 = vmatprep.subr.bf16.mxu0 0
        %893 = vmatpush2.bf16.msra.mxu0 0
        %894 = vmatprep.subr.bf16.mxu0 0
        %895 = vmatpush2.bf16.msra.mxu0 0
        %896 = vmatprep.subr.bf16.mxu0 0
        %897 = vmatpush2.bf16.msra.mxu0 0
        %898 = vmatprep.subr.bf16.mxu0 0
        %899 = vmatpush2.bf16.msra.mxu0 0
        %900 = vmatprep.subr.bf16.mxu0 0
        %901 = vmatpush2.bf16.msra.mxu0 0
        %902 = vmatprep.mubr.bf16.mxu0 0
        %903 = vmatmul.mubr.bf16.gmra.mxu0 %v868
        %v904 = vpop.f32.mrf.mxu0
        %v905 = vadd.f32 0.0, %v904
        %v906 = vpop.f32.mrf.mxu0
        %v907 = vpop.f32.mrf.mxu0
        %v908 = vadd.f32 0.0, %v907
        %v909 = vpop.f32.mrf.mxu0
        %910 = vdwg.mxu0
        %v911 = vpack.c.bf16 %v908, %v905
        %v913 = vunpack.c.l.b16 %v911
        %v914 = vunpack.c.h.b16 %v911
        %v915 = vpack.c.b16 %v913, %v913
        %v916 = vpack.c.b16 %v914, %v914
        %917 = vrot.lane.b32.xlu0 %v915, 16
        %v918 = vpop.permute.xlu0 %917
        %919 = vrot.lane.b32.xlu0 %v916, 16
        %v920 = vpop.permute.xlu0 %919
        %vm923 = vcmask 191616
        %924 = vst.msk [vmem:[#allocation2] sm:$0xf] %vm923, %v918
        %925 = vst.msk [vmem:[#allocation2 + $0x4] sm:$0xf] %vm923, %v920
        %926 = vrot.lane.b32.xlu0 %v405, 104
        %v927 = vpop.permute.xlu0 %926
        %928 = vrot.lane.b32.xlu0 %v498, 104
        %v929 = vpop.permute.xlu0 %928
        %930 = vrot.lane.b32.xlu0 %v499, 104
        %v931 = vpop.permute.xlu0 %930
        %v933 = vsel %vm500, %v927, 0
        %v936 = vsel %vm500, %v929, 0
        %v939 = vsel %vm500, %v931, 0
        %941 = vmatprep.subr.bf16.mxu0 0
        %942 = vmatpush1.bf16.xpose.msra.mxu0 0
        %943 = vmatprep.subr.bf16.mxu0 0
        %944 = vmatpush1.bf16.xpose.msra.mxu0 0
        %945 = vmatprep.subr.bf16.mxu0 0
        %946 = vmatpush1.bf16.xpose.msra.mxu0 0
        %947 = vmatprep.subr.bf16.mxu0 0
        %948 = vmatpush1.bf16.xpose.msra.mxu0 0
        %949 = vmatprep.subr.bf16.mxu0 0
        %950 = vmatpush1.bf16.xpose.msra.mxu0 0
        %951 = vmatprep.subr.bf16.mxu0 0
        %952 = vmatpush1.bf16.xpose.msra.mxu0 0
        %953 = vmatprep.subr.bf16.mxu0 0
        %954 = vmatpush1.bf16.xpose.msra.mxu0 %v939
        %955 = vmatprep.subr.bf16.mxu0 0
        %956 = vmatpush1.bf16.xpose.msra.mxu0 %v936
        %957 = vmatprep.subr.bf16.mxu0 0
        %958 = vmatpush2.bf16.xpose.msra.mxu0 0
        %959 = vmatprep.subr.bf16.mxu0 0
        %960 = vmatpush2.bf16.xpose.msra.mxu0 0
        %961 = vmatprep.subr.bf16.mxu0 0
        %962 = vmatpush2.bf16.xpose.msra.mxu0 0
        %963 = vmatprep.subr.bf16.mxu0 0
        %964 = vmatpush2.bf16.xpose.msra.mxu0 0
        %965 = vmatprep.subr.bf16.mxu0 0
        %966 = vmatpush2.bf16.xpose.msra.mxu0 0
        %967 = vmatprep.subr.bf16.mxu0 0
        %968 = vmatpush2.bf16.xpose.msra.mxu0 0
        %969 = vmatprep.subr.bf16.mxu0 0
        %970 = vmatpush2.bf16.xpose.msra.mxu0 0
        %971 = vmatprep.subr.bf16.mxu0 0
        %972 = vmatpush2.bf16.xpose.msra.mxu0 0
        %973 = vmatprep.mubr.bf16.mxu0 0
        %974 = vmatmul.mubr.bf16.gmra.mxu0 %v933
        %v975 = vpop.f32.mrf.mxu0
        %v976 = vadd.f32 0.0, %v975
        %v977 = vpop.f32.mrf.mxu0
        %v978 = vpop.f32.mrf.mxu0
        %v979 = vadd.f32 0.0, %v978
        %v980 = vpop.f32.mrf.mxu0
        %981 = vdwg.mxu0
        %v982 = vsel %vm360, %v976, -inf
        %983 = vmax.xlane.f32.xlu0 %v982
        %v984 = vpop.xlane.xlu0 %983
        %v985 = vsel %vm360, %v979, -inf
        %986 = vmax.xlane.f32.xlu0 %v985
        %v987 = vpop.xlane.xlu0 %986
        %v988 = vsub.f32 %v976, %v984
        %v989 = vsub.f32 %v979, %v987
        %v990 = vmul.f32 %v988, 1.442695
        %v991 = vpow.pop %v990
        %v992 = vmul.f32 %v989, 1.442695
        %v993 = vpow.pop %v992
        %v994 = vsel %vm360, %v991, 0.0
        %995 = vadd.xlane.f32.xlu0 %v994
        %v996 = vpop.xlane.xlu0 %995
        %v997 = vsel %vm360, %v993, 0.0
        %998 = vadd.xlane.f32.xlu0 %v997
        %v999 = vpop.xlane.xlu0 %998
        %v1000 = vrcp.pop %v996
        %v1001 = vrcp.pop %v999
        %v1002 = vmul.f32 %v991, %v1000
        %v1003 = vmul.f32 %v993, %v1001
        %v1004 = vpack.c.bf16 %v1003, %v1002
        %1005 = vrot.lane.b32.xlu0 %v498, 72
        %v1006 = vpop.permute.xlu0 %1005
        %1007 = vrot.lane.b32.xlu0 %v499, 72
        %v1008 = vpop.permute.xlu0 %1007
        %v1012 = vsel %vm360, %v1004, 0
        %1014 = vmatprep.subr.bf16.mxu0 0
        %1015 = vmatpush1.bf16.msra.mxu0 0
        %1016 = vmatprep.subr.bf16.mxu0 0
        %1017 = vmatpush1.bf16.msra.mxu0 0
        %1018 = vmatprep.subr.bf16.mxu0 0
        %1019 = vmatpush1.bf16.msra.mxu0 0
        %1020 = vmatprep.subr.bf16.mxu0 0
        %1021 = vmatpush1.bf16.msra.mxu0 0
        %1022 = vmatprep.subr.bf16.mxu0 0
        %1023 = vmatpush1.bf16.msra.mxu0 0
        %1024 = vmatprep.subr.bf16.mxu0 0
        %1025 = vmatpush1.bf16.msra.mxu0 0
        %1026 = vmatprep.subr.bf16.mxu0 0
        %1027 = vmatpush1.bf16.msra.mxu0 %v1008
        %1028 = vmatprep.subr.bf16.mxu0 0
        %1029 = vmatpush1.bf16.msra.mxu0 %v1006
        %1030 = vmatprep.subr.bf16.mxu0 0
        %1031 = vmatpush2.bf16.msra.mxu0 0
        %1032 = vmatprep.subr.bf16.mxu0 0
        %1033 = vmatpush2.bf16.msra.mxu0 0
        %1034 = vmatprep.subr.bf16.mxu0 0
        %1035 = vmatpush2.bf16.msra.mxu0 0
        %1036 = vmatprep.subr.bf16.mxu0 0
        %1037 = vmatpush2.bf16.msra.mxu0 0
        %1038 = vmatprep.subr.bf16.mxu0 0
        %1039 = vmatpush2.bf16.msra.mxu0 0
        %1040 = vmatprep.subr.bf16.mxu0 0
        %1041 = vmatpush2.bf16.msra.mxu0 0
        %1042 = vmatprep.subr.bf16.mxu0 0
        %1043 = vmatpush2.bf16.msra.mxu0 0
        %1044 = vmatprep.subr.bf16.mxu0 0
        %1045 = vmatpush2.bf16.msra.mxu0 0
        %1046 = vmatprep.mubr.bf16.mxu0 0
        %1047 = vmatmul.mubr.bf16.gmra.mxu0 %v1012
        %v1048 = vpop.f32.mrf.mxu0
        %v1049 = vadd.f32 0.0, %v1048
        %v1050 = vpop.f32.mrf.mxu0
        %v1051 = vpop.f32.mrf.mxu0
        %v1052 = vadd.f32 0.0, %v1051
        %v1053 = vpop.f32.mrf.mxu0
        %1054 = vdwg.mxu0
        %v1055 = vpack.c.bf16 %v1052, %v1049
        %v1057 = vunpack.c.l.b16 %v1055
        %v1058 = vunpack.c.h.b16 %v1055
        %v1059 = vpack.c.b16 %v1057, %v1057
        %v1060 = vpack.c.b16 %v1058, %v1058
        %1061 = vrot.lane.b32.xlu0 %v1059, 24
        %v1062 = vpop.permute.xlu0 %1061
        %1063 = vrot.lane.b32.xlu0 %v1060, 24
        %v1064 = vpop.permute.xlu0 %1063
        %vm1067 = vcmask 257216
        %1068 = vst.msk [vmem:[#allocation2] sm:$0xf] %vm1067, %v1062
        %1069 = vst.msk [vmem:[#allocation2 + $0x4] sm:$0xf] %vm1067, %v1064
        %v1070 = vld [vmem:[#allocation2] sm:$0xf]
        %v1071 = vld [vmem:[#allocation2 + $0x4] sm:$0xf]
        %v1072 = vld [vmem:[%s6] sm:$0xf]
        %v1073 = vld [vmem:[%s6 + $0x4] sm:$0xf]
        %v1074 = vld [vmem:[%s6 + $0x8] sm:$0xf]
        %v1075 = vld [vmem:[%s6 + $0xc] sm:$0xf]
        %v1076 = vld [vmem:[%s7] sm:$0x1]
        %v1078 = vlaneseq
        %v1079 = vshrl.u32 %v1078, 7
        %v1080 = vsub.s32 0, %v1079
        %v1081 = vrot.slane %v1076, %v1080
        %v1085 = vunpack.c.l.b16 %v1070
        %v1086 = vunpack.c.l.b16 %v1071
        %v1087 = vpack.c.b16 %v1086, %v1085
        %v1092 = vunpack.c.l.b16 %v1072
        %v1093 = vunpack.c.l.b16 %v1073
        %v1094 = vunpack.c.l.b16 %v1074
        %v1095 = vunpack.c.l.b16 %v1075
        %v1096 = vpack.c.b16 %v1093, %v1092
        %v1097 = vpack.c.b16 %v1095, %v1094
        %v1101 = vsel %vm360, %v1087, 0
        %1103 = vmatprep.subr.bf16.mxu0 0
        %1104 = vmatpush1.bf16.msra.mxu0 0
        %1105 = vmatprep.subr.bf16.mxu0 0
        %1106 = vmatpush1.bf16.msra.mxu0 0
        %1107 = vmatprep.subr.bf16.mxu0 0
        %1108 = vmatpush1.bf16.msra.mxu0 0
        %1109 = vmatprep.subr.bf16.mxu0 0
        %1110 = vmatpush1.bf16.msra.mxu0 0
        %1111 = vmatprep.subr.bf16.mxu0 0
        %1112 = vmatpush1.bf16.msra.mxu0 0
        %1113 = vmatprep.subr.bf16.mxu0 0
        %1114 = vmatpush1.bf16.msra.mxu0 0
        %1115 = vmatprep.subr.bf16.mxu0 0
        %1116 = vmatpush1.bf16.msra.mxu0 %v1097
        %1117 = vmatprep.subr.bf16.mxu0 0
        %1118 = vmatpush1.bf16.msra.mxu0 %v1096
        %1119 = vmatprep.subr.bf16.mxu0 0
        %1120 = vmatpush2.bf16.msra.mxu0 0
        %1121 = vmatprep.subr.bf16.mxu0 0
        %1122 = vmatpush2.bf16.msra.mxu0 0
        %1123 = vmatprep.subr.bf16.mxu0 0
        %1124 = vmatpush2.bf16.msra.mxu0 0
        %1125 = vmatprep.subr.bf16.mxu0 0
        %1126 = vmatpush2.bf16.msra.mxu0 0
        %1127 = vmatprep.subr.bf16.mxu0 0
        %1128 = vmatpush2.bf16.msra.mxu0 0
        %1129 = vmatprep.subr.bf16.mxu0 0
        %1130 = vmatpush2.bf16.msra.mxu0 0
        %1131 = vmatprep.subr.bf16.mxu0 0
        %1132 = vmatpush2.bf16.msra.mxu0 0
        %1133 = vmatprep.subr.bf16.mxu0 0
        %1134 = vmatpush2.bf16.msra.mxu0 0
        %1135 = vmatprep.mubr.bf16.mxu0 0
        %1136 = vmatmul.mubr.bf16.gmra.mxu0 %v1101
        %v1137 = vpop.f32.mrf.mxu0
        %v1138 = vadd.f32 %v1081, %v1137
        %v1139 = vpop.f32.mrf.mxu0
        %v1140 = vpop.f32.mrf.mxu0
        %v1141 = vadd.f32 %v1081, %v1140
        %v1142 = vpop.f32.mrf.mxu0
        %1143 = vdwg.mxu0
        %v1144 = vpack.c.bf16 %v1141, %v1138
        %v1146 = vunpack.c.l.b16 %v1144
        %v1147 = vunpack.c.h.b16 %v1144
        %v1148 = vpack.c.b16 %v1146, %v1146
        %v1149 = vpack.c.b16 %v1147, %v1147
        %vm1152 = vcmask 257024
        %1153 = vst.msk [vmem:[%s315] sm:$0xf] %vm1152, %v1148
        %1154 = vst.msk [vmem:[%s315 + $0x4] sm:$0xf] %vm1152, %v1149
        %s1155 = sand.u32 %s208, 1
        %s1156 = scalar_lea.sflag [#allocation4], %s1155
        %s1157 = sand.u32 %s208, 1
        %s1158 = smul.addr %s1157, 8
        %s1159 = scalar_lea.vmem [#allocation3], %s1158
        // Predicated region
        $region53: #{cross_attention_pallas.1} parent=51 // pred_check
          %p1160 = pneg %p218
        $region54: #{cross_attention_pallas.1} parent=51 // pred_check_branch
          %1162 = sbr.rel (%p1160) target = $region56
        $region55: #{cross_attention_pallas.1} parent=51 // pred_region
          %s1163 = smul.u32 2, %s22
          %s1165 = ssub.s32 128, 128
          %1166 = vsyncadd %s1156, %s1165
          %s1167 = smul.addr %s1163, 64
          %s1168 = scalar_lea.hbm %s8, %s1167
          %s1169 = sshll.u32 %s1159, 4
          %s1170 = int_to_ptr.vmem [resolvable:$true] %s1169
          %1175 = dma.vmem_to_hbm [thread:$0]  %s1170, 128, %s1168, %s1156, 64, 64, 4
        $region56: #{cross_attention_pallas.1} parent=51 // pred_fallthru
          _
      $region52: #{cross_attention_pallas.1} parent=5 // pred_fallthru
        _
      %p1176 = scmp.le.s32.totalorder 2, %s17
      // Predicated region
      $region57: #{cross_attention_pallas.1} parent=5 // pred_check
        %p1177 = pneg %p1176
      $region58: #{cross_attention_pallas.1} parent=5 // pred_check_branch
        %1179 = sbr.rel (%p1177) target = $region60
      $region59: #{cross_attention_pallas.1} parent=5 // pred_region
        %s1180 = ssub.s32 %s17, 2
        // Predicated region
        $region61: #{cross_attention_pallas.1} parent=59 // pred_check
          %p1181 = pneg %p224
        $region62: #{cross_attention_pallas.1} parent=59 // pred_check_branch
          %1183 = sbr.rel (%p1181) target = $region64
        $region63: #{cross_attention_pallas.1} parent=59 // pred_region
          %s1184 = sand.u32 %s209, 1
          %s1185 = scalar_lea.sflag [#allocation4], %s1184
          %s1186 = sand.u32 %s209, 1
          %s1187 = smul.addr %s1186, 8
          %s1188 = scalar_lea.vmem [#allocation3], %s1187
          %1189 = dma.done %s1185, 128
        $region64: #{cross_attention_pallas.1} parent=59 // pred_fallthru
          _
      $region60: #{cross_attention_pallas.1} parent=5 // pred_fallthru
        _
    $region6: #{cross_attention_pallas.1} parent=1 // loop_footer
      %s21 = sadd.s32 1, %s17
    $region7: #{cross_attention_pallas.1} parent=1 // loop_footer_branch
      %16 = sbr.rel target = $region3
    $region8: #{cross_attention_pallas.1} parent=1 // loop_exit
      _
    %1190 = vsyncpa [#allocation4], 1
    %s1191 = scalar_lea.sflag [#allocation4], 1
    %1192 = vsyncpa %s1191, 1

</llo_original>
